<compile_context>
chip_gen: v7x
topology: tpu7x:2x2x1
jax: 0.10.0
libtpu: 0.0.40
codegen_flags: <defaults>
</compile_context>

<pallas_src>
import jax
import jax.numpy as jnp
from jax.experimental import pallas as pl
from jax.experimental.pallas import tpu as pltpu


def _round_up(x, n):
    return ((x + n - 1) // n) * n


def _vmem_capacity_bytes():
    try:
        return int(pltpu.get_tpu_info().vmem_capacity_bytes)
    except Exception:
        return 64 * 1024 * 1024  # conservative fallback (v7x per-TC VMEM)


def _make_mlp_kernel(compute_dtype):
    def kernel(x_ref, w1_ref, b1_ref, w2_ref, b2_ref, o_ref, h_ref):
        j = pl.program_id(1)

        # First matmul + bias + ReLU: only once per M tile (j == 0); cached in the
        # VMEM scratch in compute dtype and reused for every N tile.
        @pl.when(j == 0)
        def _():
            x = x_ref[...].astype(compute_dtype)  # in-kernel cast (VPU, hidden under MXU)
            h = jnp.dot(x, w1_ref[...], preferred_element_type=jnp.float32)
            h = jnp.maximum(h + b1_ref[...], 0.0)  # bias add + ReLU in f32 accumulator
            h_ref[...] = h.astype(compute_dtype)

        y = jnp.dot(h_ref[...], w2_ref[...], preferred_element_type=jnp.float32)
        y = y + b2_ref[...]
        # Dropout(p) in eval mode is identity; nothing to do.
        # TODO(synk): training-mode dropout would use pltpu.prng_seed / prng_random_bits.
        o_ref[...] = y.astype(o_ref.dtype)

    return kernel


def prepare_mlp_projector_params(w1, b1, w2, b2, *, compute_dtype=jnp.bfloat16):
    """One-time parameter prep, hoisted out of the per-call hot path.

    Returns (w1c, b1_2d, w2c, b2_2d): weights in the MXU compute dtype, biases as
    f32 row vectors (added to the f32 accumulator inside the kernel).
    """
    compute_dtype = jnp.dtype(compute_dtype)
    return (
        w1.astype(compute_dtype),
        b1.reshape(1, -1).astype(jnp.float32),
        w2.astype(compute_dtype),
        b2.reshape(1, -1).astype(jnp.float32),
    )


def mlp_projector_apply(data, w1c, b1_2d, w2c, b2_2d):
    """Apply the fused MLP projector with already-prepared parameters."""
    out_dtype = data.dtype
    compute_dtype = w1c.dtype
    d_in = w1c.shape[0]
    d_out = w2c.shape[1]
    lead_shape = data.shape[:-1]

    x = data.reshape(-1, d_in)
    m = x.shape[0]

    vmem_cap = _vmem_capacity_bytes()
    budget = int(vmem_cap * 0.70)      # tile-selection budget (headroom inside the limit)
    vmem_limit = int(vmem_cap * 0.80)  # explicit limit, safely below physical VMEM

    c_size = jnp.dtype(compute_dtype).itemsize
    x_size = jnp.dtype(x.dtype).itemsize
    o_size = jnp.dtype(out_dtype).itemsize

    # Bigger M slabs on 128 MiB chips (v5e/v6e); conservative on v7x (64 MiB).
    tile_m_pref = 1024 if vmem_cap >= 100 * 1024 * 1024 else 256

    def fits(tm, tn, w2_bufs):
        act = 2 * tm * d_in * x_size          # x tile (double-buffered)
        act += tm * d_in * c_size             # h scratch
        act += 2 * tm * tn * o_size           # out tile (double-buffered)
        wgt = d_in * d_in * c_size + d_in * 4               # W1 + b1 (single buffer)
        wgt += w2_bufs * (d_in * tn * c_size + tn * 4)       # W2 + b2 tiles
        return act + wgt <= budget

    # --- M tile: multiple of 256 (MXU pass size), >= 2 blocks for large m so the
    #     "parallel" axis uses both v7x TensorCores; small m -> single full block.
    if m <= 256:
        tile_m = m
    else:
        tile_m = min(tile_m_pref, _round_up(pl.cdiv(m, 2), 256))

    # --- N tile: keep W2 fully resident (read once) when it fits; otherwise tile
    #     d_out in 128-multiples so weight residency is independent of d_out.
    tile_n = None
    while tile_n is None:
        if fits(tile_m, d_out, 1):
            tile_n = d_out
        else:
            for tn in (1024, 512, 256, 128):
                if tn < d_out and fits(tile_m, tn, 2):
                    tile_n = tn
                    break
        if tile_n is None:
            if tile_m <= 256 or m <= 256:
                # Smallest sane config; let the compiler have the final word.
                # TODO(synk): K-tile the first matmul for d_in large enough that W1
                # alone no longer fits VMEM (e.g. d_in >= 8192 in bf16 on v7x).
                tile_n = min(d_out, 128)
            else:
                tile_m = max(256, tile_m // 2)

    grid_m = pl.cdiv(m, tile_m)
    grid_n = pl.cdiv(d_out, tile_n)

    # Grid-invariant operands single-buffered; W2/b2 double-buffered only when they
    # actually change across the N axis.
    invariant = {"pipeline_mode": pl.Buffered(1)}
    w2_mode = invariant if grid_n == 1 else {}

    cost = pl.CostEstimate(
        flops=2 * m * d_in * (d_in + d_out),
        transcendentals=0,
        bytes_accessed=(
            x.size * x_size
            + w1c.size * c_size + b1_2d.size * 4
            + (1 if grid_n == 1 else grid_m) * (w2c.size * c_size + b2_2d.size * 4)
            + m * d_out * o_size
        ),
    )

    out = pl.pallas_call(
        _make_mlp_kernel(compute_dtype),
        out_shape=jax.ShapeDtypeStruct((m, d_out), out_dtype),
        grid_spec=pltpu.PrefetchScalarGridSpec(
            num_scalar_prefetch=0,
            grid=(grid_m, grid_n),
            in_specs=[
                # Activations: pipelined over M (original dtype; cast in-kernel).
                pl.BlockSpec((tile_m, d_in), lambda i, j: (i, 0)),
                # W1 / b1: grid-invariant, single-buffered.
                pl.BlockSpec((d_in, d_in), lambda i, j: (0, 0), **invariant),
                pl.BlockSpec((1, d_in), lambda i, j: (0, 0), **invariant),
                # W2 / b2: tiled over the N axis.
                pl.BlockSpec((d_in, tile_n), lambda i, j: (0, j), **w2_mode),
                pl.BlockSpec((1, tile_n), lambda i, j: (0, j), **w2_mode),
            ],
            out_specs=pl.BlockSpec((tile_m, tile_n), lambda i, j: (i, j)),
            scratch_shapes=[pltpu.VMEM((tile_m, d_in), compute_dtype)],
        ),
        compiler_params=pltpu.CompilerParams(
            dimension_semantics=("parallel", "arbitrary"),
            vmem_limit_bytes=vmem_limit,
        ),
        cost_estimate=cost,
    )(x, w1c, b1_2d, w2c, b2_2d)

    return out.reshape(lead_shape + (d_out,))


def mlp_projector(data, w1, b1, w2, b2, *, compute_dtype=jnp.bfloat16):
    """Convenience wrapper: prep + apply in one call.

    NOTE: by default the MXU sees bf16 operands with f32 accumulation, which
    deviates slightly from the PyTorch f32 `data.to(weight.dtype)` contract; pass
    compute_dtype=jnp.float32 for exact parity.  For repeated calls, call
    prepare_mlp_projector_params() once and use mlp_projector_apply() directly.
    """
    params = prepare_mlp_projector_params(w1, b1, w2, b2, compute_dtype=compute_dtype)
    return mlp_projector_apply(data, *params)


if __name__ == "__main__":
    # Small shapes consistent with the module: batch=2, seq=8, in=32, out=64.
    batch, seq = 2, 8
    in_features, out_features = 32, 64

    key = jax.random.PRNGKey(0)
    k_x, k_w1, k_b1, k_w2, k_b2 = jax.random.split(key, 5)

    # Deterministic synthetic parameters (no checkpoint load).
    w1 = (jax.random.normal(k_w1, (in_features, in_features), jnp.float32)
          * (1.0 / jnp.sqrt(in_features)))
    b1 = jax.random.normal(k_b1, (in_features,), jnp.float32) * 0.01
    w2 = (jax.random.normal(k_w2, (in_features, out_features), jnp.float32)
          * (1.0 / jnp.sqrt(in_features)))
    b2 = jax.random.normal(k_b2, (out_features,), jnp.float32) * 0.01

    # Input in bfloat16 to exercise the original-dtype round-trip of forward().
    x = jax.random.normal(k_x, (batch, seq, in_features), jnp.bfloat16)

    # Prep once (hoisted out of the hot path), then run the kernel.
    params = prepare_mlp_projector_params(w1, b1, w2, b2)
    apply_fn = jax.jit(mlp_projector_apply)
    y = apply_fn(x, *params)
    jax.block_until_ready(y)

    # Pure-JAX reference mirroring the kernel's compute policy
    # (bf16 operands, f32 accumulation, f32 bias add, final cast to input dtype).
    xc = x.astype(params[0].dtype)
    h_ref = jnp.dot(xc, params[0], preferred_element_type=jnp.float32) + params[1]
    h_ref = jnp.maximum(h_ref, 0.0)
    ref = (jnp.dot(h_ref.astype(params[2].dtype), params[2],
                   preferred_element_type=jnp.float32) + params[3]).astype(x.dtype)

    assert y.shape == (batch, seq, out_features)
    assert y.dtype == x.dtype
    assert jnp.allclose(y.astype(jnp.float32), ref.astype(jnp.float32),
                        atol=1e-2, rtol=1e-2)

    print("KERNEL_OK")
</pallas_src>

<mosaic_0001>
module attributes {stable_mosaic.version = 11 : i64} {
  func.func @kernel(%arg0: i32, %arg1: i32, %arg2: memref<16x32xbf16, #tpu.memory_space<vmem>>, %arg3: memref<32x32xbf16, #tpu.memory_space<vmem>>, %arg4: memref<1x32xf32, #tpu.memory_space<vmem>>, %arg5: memref<32x64xbf16, #tpu.memory_space<vmem>>, %arg6: memref<1x64xf32, #tpu.memory_space<vmem>>, %arg7: memref<16x64xbf16, #tpu.memory_space<vmem>>, %arg8: memref<16x32xbf16, #tpu.memory_space<vmem>>) attributes {dimension_semantics = [#tpu.dimension_semantics<parallel>, #tpu.dimension_semantics<arbitrary>], iteration_bounds = array<i64: 1, 1>, scalar_prefetch = 0 : i64, scratch_operands = 1 : i64, tpu.core_type = #tpu.core_type<tc>, window_params = [{transform_indices = @transform_0, window_bounds = array<i64: 16, 32>}, {pipeline_mode = #tpu.pipeline_mode<synchronous>, transform_indices = @transform_1, window_bounds = array<i64: 32, 32>}, {pipeline_mode = #tpu.pipeline_mode<synchronous>, transform_indices = @transform_2, window_bounds = array<i64: 1, 32>}, {pipeline_mode = #tpu.pipeline_mode<synchronous>, transform_indices = @transform_3, window_bounds = array<i64: 32, 64>}, {pipeline_mode = #tpu.pipeline_mode<synchronous>, transform_indices = @transform_4, window_bounds = array<i64: 1, 64>}, {transform_indices = @transform_5, window_bounds = array<i64: 16, 64>}]} {
    %c0_i32 = arith.constant 0 : i32
    %0 = arith.cmpi eq, %arg1, %c0_i32 : i32
    %1 = arith.extui %0 : i1 to i32
    %c0_i32_0 = arith.constant 0 : i32
    %2 = arith.cmpi ne, %1, %c0_i32_0 : i32
    scf.if %2 {
      %c0_8 = arith.constant 0 : index
      %c0_9 = arith.constant 0 : index
      %11 = vector.load %arg2[%c0_8, %c0_9] : memref<16x32xbf16, #tpu.memory_space<vmem>>, vector<16x32xbf16>
      %c0_10 = arith.constant 0 : index
      %c0_11 = arith.constant 0 : index
      %12 = vector.load %arg3[%c0_10, %c0_11] : memref<32x32xbf16, #tpu.memory_space<vmem>>, vector<32x32xbf16>
      %cst_12 = arith.constant dense<0.000000e+00> : vector<16x32xf32>
      %13 = tpu.matmul %11, %12, %cst_12 {dimension_numbers = #tpu.dot_dimension_numbers<[1], [0], [0], [1], [0, 0, 1, 1], [], []>} : vector<16x32xbf16>, vector<32x32xbf16>, vector<16x32xf32> -> vector<16x32xf32>
      %c0_13 = arith.constant 0 : index
      %c0_14 = arith.constant 0 : index
      %14 = vector.load %arg4[%c0_13, %c0_14] : memref<1x32xf32, #tpu.memory_space<vmem>>, vector<1x32xf32>
      %15 = vector.broadcast %14 : vector<1x32xf32> to vector<16x32xf32>
      %16 = arith.addf %13, %15 : vector<16x32xf32>
      %cst_15 = arith.constant 0.000000e+00 : f32
      %17 = vector.broadcast %cst_15 : f32 to vector<16x32xf32>
      %18 = arith.maximumf %16, %17 : vector<16x32xf32>
      %19 = arith.truncf %18 : vector<16x32xf32> to vector<16x32xbf16>
      %c0_16 = arith.constant 0 : index
      %c0_17 = arith.constant 0 : index
      %20 = vector.load %arg8[%c0_16, %c0_17] : memref<16x32xbf16, #tpu.memory_space<vmem>>, vector<16x32xbf16>
      tpu.vector_store %arg8[%c0_16, %c0_17], %19 {strides = array<i32>} : memref<16x32xbf16, #tpu.memory_space<vmem>>, vector<16x32xbf16>,
    } else {
    }
    %c0 = arith.constant 0 : index
    %c0_1 = arith.constant 0 : index
    %3 = vector.load %arg8[%c0, %c0_1] : memref<16x32xbf16, #tpu.memory_space<vmem>>, vector<16x32xbf16>
    %c0_2 = arith.constant 0 : index
    %c0_3 = arith.constant 0 : index
    %4 = vector.load %arg5[%c0_2, %c0_3] : memref<32x64xbf16, #tpu.memory_space<vmem>>, vector<32x64xbf16>
    %cst = arith.constant dense<0.000000e+00> : vector<16x64xf32>
    %5 = tpu.matmul %3, %4, %cst {dimension_numbers = #tpu.dot_dimension_numbers<[1], [0], [0], [1], [0, 0, 1, 1], [], []>} : vector<16x32xbf16>, vector<32x64xbf16>, vector<16x64xf32> -> vector<16x64xf32>
    %c0_4 = arith.constant 0 : index
    %c0_5 = arith.constant 0 : index
    %6 = vector.load %arg6[%c0_4, %c0_5] : memref<1x64xf32, #tpu.memory_space<vmem>>, vector<1x64xf32>
    %7 = vector.broadcast %6 : vector<1x64xf32> to vector<16x64xf32>
    %8 = arith.addf %5, %7 : vector<16x64xf32>
    %9 = arith.truncf %8 : vector<16x64xf32> to vector<16x64xbf16>
    %c0_6 = arith.constant 0 : index
    %c0_7 = arith.constant 0 : index
    %10 = vector.load %arg7[%c0_6, %c0_7] : memref<16x64xbf16, #tpu.memory_space<vmem>>, vector<16x64xbf16>
    tpu.vector_store %arg7[%c0_6, %c0_7], %9 {strides = array<i32>} : memref<16x64xbf16, #tpu.memory_space<vmem>>, vector<16x64xbf16>,
    return
  }
  func.func @transform_0(%arg0: i32, %arg1: i32) -> (i32, i32) {
    %c0_i32 = arith.constant 0 : i32
    %c0_i32_0 = arith.constant 0 : i32
    return %arg0, %c0_i32 : i32, i32
  }
  func.func @transform_1(%arg0: i32, %arg1: i32) -> (i32, i32) {
    %c0_i32 = arith.constant 0 : i32
    %c0_i32_0 = arith.constant 0 : i32
    %c0_i32_1 = arith.constant 0 : i32
    return %c0_i32, %c0_i32_0 : i32, i32
  }
  func.func @transform_2(%arg0: i32, %arg1: i32) -> (i32, i32) {
    %c0_i32 = arith.constant 0 : i32
    %c0_i32_0 = arith.constant 0 : i32
    %c0_i32_1 = arith.constant 0 : i32
    return %c0_i32, %c0_i32_0 : i32, i32
  }
  func.func @transform_3(%arg0: i32, %arg1: i32) -> (i32, i32) {
    %c0_i32 = arith.constant 0 : i32
    %c0_i32_0 = arith.constant 0 : i32
    return %c0_i32, %arg1 : i32, i32
  }
  func.func @transform_4(%arg0: i32, %arg1: i32) -> (i32, i32) {
    %c0_i32 = arith.constant 0 : i32
    %c0_i32_0 = arith.constant 0 : i32
    return %c0_i32, %arg1 : i32, i32
  }
  func.func @transform_5(%arg0: i32, %arg1: i32) -> (i32, i32) {
    %c0_i32 = arith.constant 0 : i32
    return %arg0, %arg1 : i32, i32
  }
}

</mosaic_0001>

<llo_original>
// kernel: mlp_projector_apply.1
$region0: #{mlp_projector_apply.1}
  #allocation0 [shape = 'u32[]', space=smem, size = 0x4, offset = 0x4, fixed_abs, tag = 'smem constant byte address 0x4 - core index']
  #allocation1 [shape = 'u32[144,128]{1,0:T(1,128)}', space=vmem, size = 0x12000, scoped, tag = 'internal scratch']
  #allocation2 [shape = 'bf16[16,32]{1,0:T(16,128)(2,1)}', space=vmem, size = 0x1000, scoped, tag = 'scratch operand']
  %s0 = inlined_call_operand.hbm [shape: bf16[16,32], index: 0, kind: input, shape index: {}]
  %s1 = inlined_call_operand.hbm [shape: bf16[32,32], index: 1, kind: input, shape index: {}]
  %s2 = inlined_call_operand.vmem [shape: f32[1,32], index: 2, kind: input, shape index: {}]
  %s3 = inlined_call_operand.hbm [shape: bf16[32,64], index: 3, kind: input, shape index: {}]
  %s4 = inlined_call_operand.vmem [shape: f32[1,64], index: 4, kind: input, shape index: {}]
  %s5 = inlined_call_operand.hbm [shape: bf16[16,64], index: 5, kind: output, shape index: {}]
  %s6 = sld [smem:[#allocation0]]
  $region46: #{mlp_projector_apply.1} parent=0
    _
  %s8 = ssub.s32 1, %s6
  %s9 = scalar_select 0, %s8, %s6
  $region1: #{mlp_projector_apply.1} parent=0
    #allocation3 [shape = 'u8[4096]{0}', space=vmem, size = 0x1000, scoped, tag = 'input window, operand 0, single buffered']
    #allocation4 [shape = 's32[1]{0}', space=sflag, size = 0x4, scoped, tag = 'scoped memory for mlp_projector_apply.1']
    #allocation5 [shape = 's32[1]{0}', space=sflag, size = 0x4, scoped, tag = 'scoped memory for mlp_projector_apply.1']
    #allocation6 [shape = 'u8[8192]{0}', space=vmem, size = 0x2000, scoped, tag = 'input window, operand 1, single buffered']
    #allocation7 [shape = 's32[1]{0}', space=sflag, size = 0x4, scoped, tag = 'scoped memory for mlp_projector_apply.1']
    #allocation8 [shape = 'u8[8192]{0}', space=vmem, size = 0x2000, scoped, tag = 'input window, operand 3, single buffered']
    #allocation9 [shape = 'u8[4096]{0}', space=vmem, size = 0x1000, scoped, tag = 'output window, operand 0, single buffered']
    %10 = vsyncpa [#allocation4], 0
    %11 = vsyncpa [#allocation7], 0
    %12 = vsyncpa [#allocation5], 0
    // Predicated region
    $region2: #{mlp_projector_apply.1} parent=1 // pred_check
      _
    $region3: #{mlp_projector_apply.1} parent=1 // pred_check_branch
      %14 = sbr.rel (0) target = $region5
    $region4: #{mlp_projector_apply.1} parent=1 // pred_region
      %s16 = ssub.s32 128, 128
      %17 = vsyncadd [#allocation4], %s16
      %s18 = sshll.u32 [#allocation3], 4
      %s19 = int_to_ptr.vmem [resolvable:$true] %s18
      %24 = dma.hbm_to_vmem [thread:$0]  %s0, 128, %s19, [#allocation4], 64, 64, 4
    $region5: #{mlp_projector_apply.1} parent=1 // pred_fallthru
      _
    // Predicated region
    $region6: #{mlp_projector_apply.1} parent=1 // pred_check
      _
    $region7: #{mlp_projector_apply.1} parent=1 // pred_check_branch
      %26 = sbr.rel (0) target = $region9
    $region8: #{mlp_projector_apply.1} parent=1 // pred_region
      %s28 = ssub.s32 256, 256
      %29 = vsyncadd [#allocation7], %s28
      %s30 = sshll.u32 [#allocation6], 4
      %s31 = int_to_ptr.vmem [resolvable:$true] %s30
      %36 = dma.hbm_to_vmem [thread:$0]  %s1, 256, %s31, [#allocation7], 64, 64, 4
    $region9: #{mlp_projector_apply.1} parent=1 // pred_fallthru
      _
    // Predicated region
    $region10: #{mlp_projector_apply.1} parent=1 // pred_check
      _
    $region11: #{mlp_projector_apply.1} parent=1 // pred_check_branch
      %38 = sbr.rel (0) target = $region13
    $region12: #{mlp_projector_apply.1} parent=1 // pred_region
      _
    $region13: #{mlp_projector_apply.1} parent=1 // pred_fallthru
      _
    // Predicated region
    $region14: #{mlp_projector_apply.1} parent=1 // pred_check
      _
    $region15: #{mlp_projector_apply.1} parent=1 // pred_check_branch
      %40 = sbr.rel (0) target = $region17
    $region16: #{mlp_projector_apply.1} parent=1 // pred_region
      %s42 = ssub.s32 256, 256
      %43 = vsyncadd [#allocation7], %s42
      %s44 = sshll.u32 [#allocation8], 4
      %s45 = int_to_ptr.vmem [resolvable:$true] %s44
      %50 = dma.hbm_to_vmem [thread:$0]  %s3, 256, %s45, [#allocation7], 64, 64, 4
    $region17: #{mlp_projector_apply.1} parent=1 // pred_fallthru
      _
    // Predicated region
    $region18: #{mlp_projector_apply.1} parent=1 // pred_check
      _
    $region19: #{mlp_projector_apply.1} parent=1 // pred_check_branch
      %52 = sbr.rel (0) target = $region21
    $region20: #{mlp_projector_apply.1} parent=1 // pred_region
      _
    $region21: #{mlp_projector_apply.1} parent=1 // pred_fallthru
      _
    // Predicated region
    $region22: #{mlp_projector_apply.1} parent=1 // pred_check
      _
    $region23: #{mlp_projector_apply.1} parent=1 // pred_check_branch
      %54 = sbr.rel (0) target = $region25
    $region24: #{mlp_projector_apply.1} parent=1 // pred_region
      %55 = dma.done [#allocation4], 128
    $region25: #{mlp_projector_apply.1} parent=1 // pred_fallthru
      _
    // Predicated region
    $region26: #{mlp_projector_apply.1} parent=1 // pred_check
      _
    $region27: #{mlp_projector_apply.1} parent=1 // pred_check_branch
      %57 = sbr.rel (0) target = $region29
    $region28: #{mlp_projector_apply.1} parent=1 // pred_region
      %58 = dma.done [#allocation7], 256
    $region29: #{mlp_projector_apply.1} parent=1 // pred_fallthru
      _
    // Predicated region
    $region30: #{mlp_projector_apply.1} parent=1 // pred_check
      _
    $region31: #{mlp_projector_apply.1} parent=1 // pred_check_branch
      %60 = sbr.rel (0) target = $region33
    $region32: #{mlp_projector_apply.1} parent=1 // pred_region
      %61 = dma.done [#allocation7], 256
    $region33: #{mlp_projector_apply.1} parent=1 // pred_fallthru
      _
    %p63 = scmp.eq.s32.totalorder 0, 0
    // Predicated region
    $region34: #{mlp_projector_apply.1} parent=1 // pred_check
      %p64 = pneg %p63
    $region35: #{mlp_projector_apply.1} parent=1 // pred_check_branch
      %66 = sbr.rel (%p64) target = $region37
    $region36: #{mlp_projector_apply.1} parent=1 // pred_region
      %v67 = vld [vmem:[#allocation3] sm:$0xf]
      %v68 = vld [vmem:[#allocation3 + $0x4] sm:$0xf]
      %v69 = vld [vmem:[#allocation6] sm:$0xf]
      %v70 = vld [vmem:[#allocation6 + $0x4] sm:$0xf]
      %v71 = vld [vmem:[#allocation6 + $0x8] sm:$0xf]
      %v72 = vld [vmem:[#allocation6 + $0xc] sm:$0xf]
      %v73 = vld [vmem:[%s2] sm:$0x1]
      %v75 = vlaneseq
      %v76 = vshrl.u32 %v75, 7
      %v77 = vsub.s32 0, %v76
      %v78 = vrot.slane %v73, %v77
      %v82 = vunpack.c.l.b16 %v67
      %v83 = vunpack.c.l.b16 %v68
      %v84 = vpack.c.b16 %v83, %v82
      %v89 = vunpack.c.l.b16 %v69
      %v90 = vunpack.c.l.b16 %v70
      %v91 = vunpack.c.l.b16 %v71
      %v92 = vunpack.c.l.b16 %v72
      %v93 = vpack.c.b16 %v90, %v89
      %v94 = vpack.c.b16 %v92, %v91
      %vm97 = vcmask 261120
      %v99 = vsel %vm97, %v84, 0
      %101 = vmatprep.subr.bf16.mxu0 0
      %102 = vmatpush1.bf16.msra.mxu0 %v93
      %103 = vmatprep.subr.bf16.mxu0 0
      %104 = vmatpush1.bf16.msra.mxu0 %v94
      %105 = vmatprep.subr.bf16.mxu0 0
      %106 = vmatpush1.bf16.msra.mxu0 0
      %107 = vmatprep.subr.bf16.mxu0 0
      %108 = vmatpush1.bf16.msra.mxu0 0
      %109 = vmatprep.subr.bf16.mxu0 0
      %110 = vmatpush1.bf16.msra.mxu0 0
      %111 = vmatprep.subr.bf16.mxu0 0
      %112 = vmatpush1.bf16.msra.mxu0 0
      %113 = vmatprep.subr.bf16.mxu0 0
      %114 = vmatpush1.bf16.msra.mxu0 0
      %115 = vmatprep.subr.bf16.mxu0 0
      %116 = vmatpush1.bf16.msra.mxu0 0
      %117 = vmatprep.subr.bf16.mxu0 0
      %118 = vmatpush1.bf16.msra.mxu0 0
      %119 = vmatprep.subr.bf16.mxu0 0
      %120 = vmatpush1.bf16.msra.mxu0 0
      %121 = vmatprep.subr.bf16.mxu0 0
      %122 = vmatpush1.bf16.msra.mxu0 0
      %123 = vmatprep.subr.bf16.mxu0 0
      %124 = vmatpush1.bf16.msra.mxu0 0
      %125 = vmatprep.subr.bf16.mxu0 0
      %126 = vmatpush1.bf16.msra.mxu0 0
      %127 = vmatprep.subr.bf16.mxu0 0
      %128 = vmatpush1.bf16.msra.mxu0 0
      %129 = vmatprep.subr.bf16.mxu0 0
      %130 = vmatpush1.bf16.msra.mxu0 0
      %131 = vmatprep.subr.bf16.mxu0 0
      %132 = vmatpush1.bf16.msra.mxu0 0
      %133 = vmatprep.mubr.bf16.mxu0 0
      %134 = vmatmul.mubr.bf16.gmra.mrb[0].mxu0 %v99
      %v135 = vpop.f32.mrb[0].mxu0
      %v136 = vadd.f32 %v78, %v135
      %v137 = vpop.f32.mrb[0].mxu0
      %v138 = vpop.f32.mrb[0].mxu0
      %v139 = vadd.f32 %v78, %v138
      %v140 = vpop.f32.mrb[0].mxu0
      %141 = vdwg.mxu0
      %v142 = vmax.f32 %v136, 0.0
      %v143 = vmax.f32 %v139, 0.0
      %v144 = vpack.c.bf16 %v143, %v142
      %145 = vst.msk [vmem:[#allocation2] sm:$0xff] %vm97, %v144
    $region37: #{mlp_projector_apply.1} parent=1 // pred_fallthru
      _
    %v146 = vld [vmem:[#allocation2] sm:$0xff]
    %v147 = vld [vmem:[#allocation8] sm:$0xf]
    %v148 = vld [vmem:[#allocation8 + $0x4] sm:$0xf]
    %v149 = vld [vmem:[#allocation8 + $0x8] sm:$0xf]
    %v150 = vld [vmem:[#allocation8 + $0xc] sm:$0xf]
    %v151 = vld [vmem:[%s4] sm:$0x1]
    %v153 = vlaneseq
    %v154 = vshrl.u32 %v153, 7
    %v155 = vsub.s32 0, %v154
    %v156 = vrot.slane %v151, %v155
    %v162 = vunpack.c.l.b16 %v147
    %v163 = vunpack.c.l.b16 %v148
    %v164 = vunpack.c.l.b16 %v149
    %v165 = vunpack.c.l.b16 %v150
    %v166 = vpack.c.b16 %v163, %v162
    %v167 = vpack.c.b16 %v165, %v164
    %vm170 = vcmask 261120
    %v172 = vsel %vm170, %v146, 0
    %174 = vmatprep.subr.bf16.mxu0 0
    %175 = vmatpush1.bf16.msra.mxu0 %v166
    %176 = vmatprep.subr.bf16.mxu0 0
    %177 = vmatpush1.bf16.msra.mxu0 %v167
    %178 = vmatprep.subr.bf16.mxu0 0
    %179 = vmatpush1.bf16.msra.mxu0 0
    %180 = vmatprep.subr.bf16.mxu0 0
    %181 = vmatpush1.bf16.msra.mxu0 0
    %182 = vmatprep.subr.bf16.mxu0 0
    %183 = vmatpush1.bf16.msra.mxu0 0
    %184 = vmatprep.subr.bf16.mxu0 0
    %185 = vmatpush1.bf16.msra.mxu0 0
    %186 = vmatprep.subr.bf16.mxu0 0
    %187 = vmatpush1.bf16.msra.mxu0 0
    %188 = vmatprep.subr.bf16.mxu0 0
    %189 = vmatpush1.bf16.msra.mxu0 0
    %190 = vmatprep.subr.bf16.mxu0 0
    %191 = vmatpush1.bf16.msra.mxu0 0
    %192 = vmatprep.subr.bf16.mxu0 0
    %193 = vmatpush1.bf16.msra.mxu0 0
    %194 = vmatprep.subr.bf16.mxu0 0
    %195 = vmatpush1.bf16.msra.mxu0 0
    %196 = vmatprep.subr.bf16.mxu0 0
    %197 = vmatpush1.bf16.msra.mxu0 0
    %198 = vmatprep.subr.bf16.mxu0 0
    %199 = vmatpush1.bf16.msra.mxu0 0
    %200 = vmatprep.subr.bf16.mxu0 0
    %201 = vmatpush1.bf16.msra.mxu0 0
    %202 = vmatprep.subr.bf16.mxu0 0
    %203 = vmatpush1.bf16.msra.mxu0 0
    %204 = vmatprep.subr.bf16.mxu0 0
    %205 = vmatpush1.bf16.msra.mxu0 0
    %206 = vmatprep.mubr.bf16.mxu0 0
    %207 = vmatmul.mubr.bf16.gmra.mrb[0].mxu0 %v172
    %v208 = vpop.f32.mrb[0].mxu0
    %v209 = vadd.f32 %v156, %v208
    %v210 = vpop.f32.mrb[0].mxu0
    %v211 = vpop.f32.mrb[0].mxu0
    %v212 = vadd.f32 %v156, %v211
    %v213 = vpop.f32.mrb[0].mxu0
    %214 = vdwg.mxu0
    %v215 = vpack.c.bf16 %v212, %v209
    %v217 = vunpack.c.l.b16 %v215
    %v218 = vunpack.c.h.b16 %v215
    %v219 = vpack.c.b16 %v217, %v217
    %v220 = vpack.c.b16 %v218, %v218
    %vm223 = vcmask 519168
    %224 = vst.msk [vmem:[#allocation9] sm:$0xf] %vm223, %v219
    %225 = vst.msk [vmem:[#allocation9 + $0x4] sm:$0xf] %vm223, %v220
    // Predicated region
    $region38: #{mlp_projector_apply.1} parent=1 // pred_check
      _
    $region39: #{mlp_projector_apply.1} parent=1 // pred_check_branch
      %227 = sbr.rel (0) target = $region41
    $region40: #{mlp_projector_apply.1} parent=1 // pred_region
      %s229 = ssub.s32 128, 128
      %230 = vsyncadd [#allocation5], %s229
      %s231 = sshll.u32 [#allocation9], 4
      %s232 = int_to_ptr.vmem [resolvable:$true] %s231
      %237 = dma.vmem_to_hbm [thread:$0]  %s232, 128, %s5, [#allocation5], 64, 64, 4
    $region41: #{mlp_projector_apply.1} parent=1 // pred_fallthru
      _
    // Predicated region
    $region42: #{mlp_projector_apply.1} parent=1 // pred_check
      _
    $region43: #{mlp_projector_apply.1} parent=1 // pred_check_branch
      %239 = sbr.rel (0) target = $region45
    $region44: #{mlp_projector_apply.1} parent=1 // pred_region
      %240 = dma.done [#allocation5], 128
    $region45: #{mlp_projector_apply.1} parent=1 // pred_fallthru
      _
    %241 = vsyncpa [#allocation4], 1
    %242 = vsyncpa [#allocation7], 1
    %243 = vsyncpa [#allocation5], 1

</llo_original>
